<compile_context>
chip_gen: v7x
topology: tpu7x:2x2x1
jax: 0.10.0
libtpu: 0.0.40
codegen_flags: <defaults>
</compile_context>

<pallas_src>
import functools

import jax
import jax.numpy as jnp
from jax import lax
from jax.experimental import pallas as pl
from jax.experimental.pallas import tpu as pltpu


def _embedding_gather_kernel(ids_ref, w_ref, o_ref, rows_ref, sems, *, nbuf):
    """DMA-gather TB embedding rows from HBM for the current output tile.

    ids_ref : SMEM (n_pad,) int32   all token ids (scalar prefetch)
    w_ref   : HBM  (V, D)           embedding table, never copied wholesale
    o_ref   : VMEM (TB, D)          output tile for this grid step
    rows_ref: VMEM (TB, D)          staging tile the per-row DMAs land in
    sems    : DMA semaphores (NBUF,) -- NBUF row copies kept in flight
    """
    tile = pl.program_id(0)
    tb = o_ref.shape[0]
    V = w_ref.shape[0]
    base = tile * tb

    def start_row(r, slot):
        # Clamp so an invalid id can never become an out-of-bounds DMA.
        tok = jnp.clip(ids_ref[base + r], 0, V - 1)
        pltpu.make_async_copy(
            w_ref.at[pl.ds(tok, 1), :],
            rows_ref.at[pl.ds(r, 1), :],
            sems.at[slot],
        ).start()

    # Prime: put the first nbuf row fetches in flight (nbuf <= tb, static).
    for r in range(nbuf):
        start_row(r, r)

    def body(r, carry):
        slot = r % nbuf
        # Wait for row r's copy (shape descriptor only; same bytes as every row).
        pltpu.make_async_copy(
            w_ref.at[pl.ds(0, 1), :],
            rows_ref.at[pl.ds(0, 1), :],
            sems.at[slot],
        ).wait()

        # Reuse this slot's semaphore for the row nbuf ahead.
        @pl.when(r + nbuf < tb)
        def _():
            start_row(r + nbuf, slot)

        return carry

    lax.fori_loop(0, tb, body, 0)

    # Every row has landed; one large lane-dense store into the output block.
    o_ref[...] = rows_ref[...]


def _round_up(x: int, m: int) -> int:
    return ((x + m - 1) // m) * m


def embedding_forward(
    token_ids: jax.Array, weights: jax.Array, *, tb: int = 256, nbuf: int = 8
) -> jax.Array:
    """Equivalent of `weights[token_ids]` (PyTorch Embedding.forward)."""
    V, D = weights.shape
    orig_shape = token_ids.shape

    ids_flat = token_ids.reshape(-1).astype(jnp.int32)
    n = int(ids_flat.shape[0])
    if n == 0:
        return jnp.zeros((*orig_shape, D), weights.dtype)

    # Token-tile size: big enough to amortize the ~0.35 us per-step pipeline
    # overhead and give a large lane-dense output writeback, but clamped so
    # tiny batches don't gather / write back redundant padded rows.
    tb = max(8, min(tb, _round_up(n, 8)))
    nbuf = max(1, min(nbuf, tb))  # in-flight row DMAs; must not exceed tb

    # Pad the flattened token stream to a multiple of the tile; padded slots
    # gather row 0 (valid) and are sliced off afterwards.
    n_pad = _round_up(n, tb)
    if n_pad != n:
        ids_flat = jnp.pad(ids_flat, (0, n_pad - n))

    grid = (n_pad // tb,)
    kernel = functools.partial(_embedding_gather_kernel, nbuf=nbuf)

    out = pl.pallas_call(
        kernel,
        out_shape=jax.ShapeDtypeStruct((n_pad, D), weights.dtype),
        grid_spec=pltpu.PrefetchScalarGridSpec(
            # Token ids land in SMEM before the grid runs -> usable as DMA indices.
            num_scalar_prefetch=1,
            grid=grid,
            in_specs=[
                # Embedding table stays in HBM; rows are DMA-gathered on demand.
                pl.BlockSpec(memory_space=pl.ANY),
            ],
            out_specs=pl.BlockSpec((tb, D), lambda i, ids: (i, 0)),
            scratch_shapes=[
                pltpu.VMEM((tb, D), weights.dtype),  # staging tile for gathered rows
                pltpu.SemaphoreType.DMA((nbuf,)),    # nbuf row copies in flight
            ],
        ),
        compiler_params=pltpu.CompilerParams(
            # Tiles are independent; executed sequentially on v5e/v6e.
            # TODO(synk): pltpu.CORE_PARALLEL / core_map for v7x 2-TC sharding.
            dimension_semantics=("arbitrary",),
        ),
    )(ids_flat, weights)

    out = out[:n]
    return out.reshape(*orig_shape, D)


def init_embedding_weights(key, num_embeddings: int, embedding_dim: int, dtype=jnp.float32):
    # Matches torch.nn.init.trunc_normal_(mean=0, std=1, a=-3, b=3).
    return jax.random.truncated_normal(
        key, lower=-3.0, upper=3.0, shape=(num_embeddings, embedding_dim)
    ).astype(dtype)


if __name__ == "__main__":
    key = jax.random.PRNGKey(0)
    k_w, k_ids = jax.random.split(key)

    num_embeddings = 64
    embedding_dim = 128
    batch, seq = 2, 8

    weights = init_embedding_weights(k_w, num_embeddings, embedding_dim)
    token_ids = jax.random.randint(k_ids, (batch, seq), 0, num_embeddings, dtype=jnp.int32)

    out = embedding_forward(token_ids, weights)
    out = jax.block_until_ready(out)

    # Reference check against plain JAX gather (DMA gather is bit-exact).
    ref = weights[token_ids]
    assert out.shape == (batch, seq, embedding_dim), out.shape
    assert out.dtype == weights.dtype
    assert jnp.array_equal(out, ref), "mismatch vs reference gather"

    print("KERNEL_OK")
</pallas_src>

<mosaic_0001>
module attributes {stable_mosaic.version = 11 : i64} {
  func.func @_embedding_gather_kernel(%arg0: i32, %arg1: memref<16xi32, #tpu.memory_space<smem>>, %arg2: memref<64x128xf32, #tpu.memory_space<any>>, %arg3: memref<16x128xf32, #tpu.memory_space<vmem>>, %arg4: memref<16x128xf32, #tpu.memory_space<vmem>>, %arg5: memref<8x!tpu.dma_semaphore, #tpu.memory_space<semaphore_mem>>) attributes {dimension_semantics = [#tpu.dimension_semantics<arbitrary>], iteration_bounds = array<i64: 1>, scalar_prefetch = 1 : i64, scratch_operands = 2 : i64, tpu.core_type = #tpu.core_type<tc>, window_params = [{}, {transform_indices = @transform_1, window_bounds = array<i64: 16, 128>}]} {
    %c16_i32 = arith.constant 16 : i32
    %0 = arith.muli %arg0, %c16_i32 : i32
    %c0_i32 = arith.constant 0 : i32
    %1 = arith.addi %0, %c0_i32 : i32
    %2 = arith.index_cast %1 : i32 to index
    %3 = memref.load %arg1[%2] : memref<16xi32, #tpu.memory_space<smem>>
    %c0_i32_0 = arith.constant 0 : i32
    %c63_i32 = arith.constant 63 : i32
    %4 = arith.maxsi %c0_i32_0, %3 : i32
    %5 = arith.minsi %c63_i32, %4 : i32
    %c0_i32_1 = arith.constant 0 : i32
    %c0_i32_2 = arith.constant 0 : i32
    %6 = tpu.memref_slice %arg2[%5, %c0_i32_2] : memref<64x128xf32, #tpu.memory_space<any>> -> memref<1x128xf32, #tpu.memory_space<any>>
    %c0_i32_3 = arith.constant 0 : i32
    %c0_i32_4 = arith.constant 0 : i32
    %7 = tpu.memref_slice %arg4[%c0_i32_3, %c0_i32_4] : memref<16x128xf32, #tpu.memory_space<vmem>> -> memref<1x128xf32, #tpu.memory_space<vmem>>
    %8 = tpu.memref_slice %arg5[%c0_i32_1] : memref<8x!tpu.dma_semaphore, #tpu.memory_space<semaphore_mem>> -> memref<1x!tpu.dma_semaphore, #tpu.memory_space<semaphore_mem>>
    %9 = tpu.memref_squeeze %8 : memref<1x!tpu.dma_semaphore, #tpu.memory_space<semaphore_mem>> -> memref<!tpu.dma_semaphore, #tpu.memory_space<semaphore_mem>>
    tpu.enqueue_dma source(%6 : memref<1x128xf32, #tpu.memory_space<any>>) target(%7 : memref<1x128xf32, #tpu.memory_space<vmem>>) target_semaphore(%9 : memref<!tpu.dma_semaphore, #tpu.memory_space<semaphore_mem>>)
    %c1_i32 = arith.constant 1 : i32
    %10 = arith.addi %0, %c1_i32 : i32
    %11 = arith.index_cast %10 : i32 to index
    %12 = memref.load %arg1[%11] : memref<16xi32, #tpu.memory_space<smem>>
    %c0_i32_5 = arith.constant 0 : i32
    %c63_i32_6 = arith.constant 63 : i32
    %13 = arith.maxsi %c0_i32_5, %12 : i32
    %14 = arith.minsi %c63_i32_6, %13 : i32
    %c1_i32_7 = arith.constant 1 : i32
    %c0_i32_8 = arith.constant 0 : i32
    %15 = tpu.memref_slice %arg2[%14, %c0_i32_8] : memref<64x128xf32, #tpu.memory_space<any>> -> memref<1x128xf32, #tpu.memory_space<any>>
    %c1_i32_9 = arith.constant 1 : i32
    %c0_i32_10 = arith.constant 0 : i32
    %16 = tpu.memref_slice %arg4[%c1_i32_9, %c0_i32_10] : memref<16x128xf32, #tpu.memory_space<vmem>> -> memref<1x128xf32, #tpu.memory_space<vmem>>
    %17 = tpu.memref_slice %arg5[%c1_i32_7] : memref<8x!tpu.dma_semaphore, #tpu.memory_space<semaphore_mem>> -> memref<1x!tpu.dma_semaphore, #tpu.memory_space<semaphore_mem>>
    %18 = tpu.memref_squeeze %17 : memref<1x!tpu.dma_semaphore, #tpu.memory_space<semaphore_mem>> -> memref<!tpu.dma_semaphore, #tpu.memory_space<semaphore_mem>>
    tpu.enqueue_dma source(%15 : memref<1x128xf32, #tpu.memory_space<any>>) target(%16 : memref<1x128xf32, #tpu.memory_space<vmem>>) target_semaphore(%18 : memref<!tpu.dma_semaphore, #tpu.memory_space<semaphore_mem>>)
    %c2_i32 = arith.constant 2 : i32
    %19 = arith.addi %0, %c2_i32 : i32
    %20 = arith.index_cast %19 : i32 to index
    %21 = memref.load %arg1[%20] : memref<16xi32, #tpu.memory_space<smem>>
    %c0_i32_11 = arith.constant 0 : i32
    %c63_i32_12 = arith.constant 63 : i32
    %22 = arith.maxsi %c0_i32_11, %21 : i32
    %23 = arith.minsi %c63_i32_12, %22 : i32
    %c2_i32_13 = arith.constant 2 : i32
    %c0_i32_14 = arith.constant 0 : i32
    %24 = tpu.memref_slice %arg2[%23, %c0_i32_14] : memref<64x128xf32, #tpu.memory_space<any>> -> memref<1x128xf32, #tpu.memory_space<any>>
    %c2_i32_15 = arith.constant 2 : i32
    %c0_i32_16 = arith.constant 0 : i32
    %25 = tpu.memref_slice %arg4[%c2_i32_15, %c0_i32_16] : memref<16x128xf32, #tpu.memory_space<vmem>> -> memref<1x128xf32, #tpu.memory_space<vmem>>
    %26 = tpu.memref_slice %arg5[%c2_i32_13] : memref<8x!tpu.dma_semaphore, #tpu.memory_space<semaphore_mem>> -> memref<1x!tpu.dma_semaphore, #tpu.memory_space<semaphore_mem>>
    %27 = tpu.memref_squeeze %26 : memref<1x!tpu.dma_semaphore, #tpu.memory_space<semaphore_mem>> -> memref<!tpu.dma_semaphore, #tpu.memory_space<semaphore_mem>>
    tpu.enqueue_dma source(%24 : memref<1x128xf32, #tpu.memory_space<any>>) target(%25 : memref<1x128xf32, #tpu.memory_space<vmem>>) target_semaphore(%27 : memref<!tpu.dma_semaphore, #tpu.memory_space<semaphore_mem>>)
    %c3_i32 = arith.constant 3 : i32
    %28 = arith.addi %0, %c3_i32 : i32
    %29 = arith.index_cast %28 : i32 to index
    %30 = memref.load %arg1[%29] : memref<16xi32, #tpu.memory_space<smem>>
    %c0_i32_17 = arith.constant 0 : i32
    %c63_i32_18 = arith.constant 63 : i32
    %31 = arith.maxsi %c0_i32_17, %30 : i32
    %32 = arith.minsi %c63_i32_18, %31 : i32
    %c3_i32_19 = arith.constant 3 : i32
    %c0_i32_20 = arith.constant 0 : i32
    %33 = tpu.memref_slice %arg2[%32, %c0_i32_20] : memref<64x128xf32, #tpu.memory_space<any>> -> memref<1x128xf32, #tpu.memory_space<any>>
    %c3_i32_21 = arith.constant 3 : i32
    %c0_i32_22 = arith.constant 0 : i32
    %34 = tpu.memref_slice %arg4[%c3_i32_21, %c0_i32_22] : memref<16x128xf32, #tpu.memory_space<vmem>> -> memref<1x128xf32, #tpu.memory_space<vmem>>
    %35 = tpu.memref_slice %arg5[%c3_i32_19] : memref<8x!tpu.dma_semaphore, #tpu.memory_space<semaphore_mem>> -> memref<1x!tpu.dma_semaphore, #tpu.memory_space<semaphore_mem>>
    %36 = tpu.memref_squeeze %35 : memref<1x!tpu.dma_semaphore, #tpu.memory_space<semaphore_mem>> -> memref<!tpu.dma_semaphore, #tpu.memory_space<semaphore_mem>>
    tpu.enqueue_dma source(%33 : memref<1x128xf32, #tpu.memory_space<any>>) target(%34 : memref<1x128xf32, #tpu.memory_space<vmem>>) target_semaphore(%36 : memref<!tpu.dma_semaphore, #tpu.memory_space<semaphore_mem>>)
    %c4_i32 = arith.constant 4 : i32
    %37 = arith.addi %0, %c4_i32 : i32
    %38 = arith.index_cast %37 : i32 to index
    %39 = memref.load %arg1[%38] : memref<16xi32, #tpu.memory_space<smem>>
    %c0_i32_23 = arith.constant 0 : i32
    %c63_i32_24 = arith.constant 63 : i32
    %40 = arith.maxsi %c0_i32_23, %39 : i32
    %41 = arith.minsi %c63_i32_24, %40 : i32
    %c4_i32_25 = arith.constant 4 : i32
    %c0_i32_26 = arith.constant 0 : i32
    %42 = tpu.memref_slice %arg2[%41, %c0_i32_26] : memref<64x128xf32, #tpu.memory_space<any>> -> memref<1x128xf32, #tpu.memory_space<any>>
    %c4_i32_27 = arith.constant 4 : i32
    %c0_i32_28 = arith.constant 0 : i32
    %43 = tpu.memref_slice %arg4[%c4_i32_27, %c0_i32_28] : memref<16x128xf32, #tpu.memory_space<vmem>> -> memref<1x128xf32, #tpu.memory_space<vmem>>
    %44 = tpu.memref_slice %arg5[%c4_i32_25] : memref<8x!tpu.dma_semaphore, #tpu.memory_space<semaphore_mem>> -> memref<1x!tpu.dma_semaphore, #tpu.memory_space<semaphore_mem>>
    %45 = tpu.memref_squeeze %44 : memref<1x!tpu.dma_semaphore, #tpu.memory_space<semaphore_mem>> -> memref<!tpu.dma_semaphore, #tpu.memory_space<semaphore_mem>>
    tpu.enqueue_dma source(%42 : memref<1x128xf32, #tpu.memory_space<any>>) target(%43 : memref<1x128xf32, #tpu.memory_space<vmem>>) target_semaphore(%45 : memref<!tpu.dma_semaphore, #tpu.memory_space<semaphore_mem>>)
    %c5_i32 = arith.constant 5 : i32
    %46 = arith.addi %0, %c5_i32 : i32
    %47 = arith.index_cast %46 : i32 to index
    %48 = memref.load %arg1[%47] : memref<16xi32, #tpu.memory_space<smem>>
    %c0_i32_29 = arith.constant 0 : i32
    %c63_i32_30 = arith.constant 63 : i32
    %49 = arith.maxsi %c0_i32_29, %48 : i32
    %50 = arith.minsi %c63_i32_30, %49 : i32
    %c5_i32_31 = arith.constant 5 : i32
    %c0_i32_32 = arith.constant 0 : i32
    %51 = tpu.memref_slice %arg2[%50, %c0_i32_32] : memref<64x128xf32, #tpu.memory_space<any>> -> memref<1x128xf32, #tpu.memory_space<any>>
    %c5_i32_33 = arith.constant 5 : i32
    %c0_i32_34 = arith.constant 0 : i32
    %52 = tpu.memref_slice %arg4[%c5_i32_33, %c0_i32_34] : memref<16x128xf32, #tpu.memory_space<vmem>> -> memref<1x128xf32, #tpu.memory_space<vmem>>
    %53 = tpu.memref_slice %arg5[%c5_i32_31] : memref<8x!tpu.dma_semaphore, #tpu.memory_space<semaphore_mem>> -> memref<1x!tpu.dma_semaphore, #tpu.memory_space<semaphore_mem>>
    %54 = tpu.memref_squeeze %53 : memref<1x!tpu.dma_semaphore, #tpu.memory_space<semaphore_mem>> -> memref<!tpu.dma_semaphore, #tpu.memory_space<semaphore_mem>>
    tpu.enqueue_dma source(%51 : memref<1x128xf32, #tpu.memory_space<any>>) target(%52 : memref<1x128xf32, #tpu.memory_space<vmem>>) target_semaphore(%54 : memref<!tpu.dma_semaphore, #tpu.memory_space<semaphore_mem>>)
    %c6_i32 = arith.constant 6 : i32
    %55 = arith.addi %0, %c6_i32 : i32
    %56 = arith.index_cast %55 : i32 to index
    %57 = memref.load %arg1[%56] : memref<16xi32, #tpu.memory_space<smem>>
    %c0_i32_35 = arith.constant 0 : i32
    %c63_i32_36 = arith.constant 63 : i32
    %58 = arith.maxsi %c0_i32_35, %57 : i32
    %59 = arith.minsi %c63_i32_36, %58 : i32
    %c6_i32_37 = arith.constant 6 : i32
    %c0_i32_38 = arith.constant 0 : i32
    %60 = tpu.memref_slice %arg2[%59, %c0_i32_38] : memref<64x128xf32, #tpu.memory_space<any>> -> memref<1x128xf32, #tpu.memory_space<any>>
    %c6_i32_39 = arith.constant 6 : i32
    %c0_i32_40 = arith.constant 0 : i32
    %61 = tpu.memref_slice %arg4[%c6_i32_39, %c0_i32_40] : memref<16x128xf32, #tpu.memory_space<vmem>> -> memref<1x128xf32, #tpu.memory_space<vmem>>
    %62 = tpu.memref_slice %arg5[%c6_i32_37] : memref<8x!tpu.dma_semaphore, #tpu.memory_space<semaphore_mem>> -> memref<1x!tpu.dma_semaphore, #tpu.memory_space<semaphore_mem>>
    %63 = tpu.memref_squeeze %62 : memref<1x!tpu.dma_semaphore, #tpu.memory_space<semaphore_mem>> -> memref<!tpu.dma_semaphore, #tpu.memory_space<semaphore_mem>>
    tpu.enqueue_dma source(%60 : memref<1x128xf32, #tpu.memory_space<any>>) target(%61 : memref<1x128xf32, #tpu.memory_space<vmem>>) target_semaphore(%63 : memref<!tpu.dma_semaphore, #tpu.memory_space<semaphore_mem>>)
    %c7_i32 = arith.constant 7 : i32
    %64 = arith.addi %0, %c7_i32 : i32
    %65 = arith.index_cast %64 : i32 to index
    %66 = memref.load %arg1[%65] : memref<16xi32, #tpu.memory_space<smem>>
    %c0_i32_41 = arith.constant 0 : i32
    %c63_i32_42 = arith.constant 63 : i32
    %67 = arith.maxsi %c0_i32_41, %66 : i32
    %68 = arith.minsi %c63_i32_42, %67 : i32
    %c7_i32_43 = arith.constant 7 : i32
    %c0_i32_44 = arith.constant 0 : i32
    %69 = tpu.memref_slice %arg2[%68, %c0_i32_44] : memref<64x128xf32, #tpu.memory_space<any>> -> memref<1x128xf32, #tpu.memory_space<any>>
    %c7_i32_45 = arith.constant 7 : i32
    %c0_i32_46 = arith.constant 0 : i32
    %70 = tpu.memref_slice %arg4[%c7_i32_45, %c0_i32_46] : memref<16x128xf32, #tpu.memory_space<vmem>> -> memref<1x128xf32, #tpu.memory_space<vmem>>
    %71 = tpu.memref_slice %arg5[%c7_i32_43] : memref<8x!tpu.dma_semaphore, #tpu.memory_space<semaphore_mem>> -> memref<1x!tpu.dma_semaphore, #tpu.memory_space<semaphore_mem>>
    %72 = tpu.memref_squeeze %71 : memref<1x!tpu.dma_semaphore, #tpu.memory_space<semaphore_mem>> -> memref<!tpu.dma_semaphore, #tpu.memory_space<semaphore_mem>>
    tpu.enqueue_dma source(%69 : memref<1x128xf32, #tpu.memory_space<any>>) target(%70 : memref<1x128xf32, #tpu.memory_space<vmem>>) target_semaphore(%72 : memref<!tpu.dma_semaphore, #tpu.memory_space<semaphore_mem>>)
    %c0_i32_47 = arith.constant 0 : i32
    %c16_i32_48 = arith.constant 16 : i32
    %73 = arith.addi %c0_i32_47, %c16_i32_48 : i32
    %c1_i32_49 = arith.constant 1 : i32
    scf.for %arg6 = %c0_i32_47 to %73 step %c1_i32_49  : i32 {
      %c8_i32 = arith.constant 8 : i32
      %c0_i32_54 = arith.constant 0 : i32
      %76 = arith.cmpi eq, %c8_i32, %c0_i32_54 : i32
      %c1_i32_55 = arith.constant 1 : i32
      %77 = arith.select %76, %c1_i32_55, %c8_i32 : i32
      %78 = arith.remsi %arg6, %77 : i32
      %c0_i32_56 = arith.constant 0 : i32
      %79 = arith.cmpi ne, %78, %c0_i32_56 : i32
      %c0_i32_57 = arith.constant 0 : i32
      %80 = arith.cmpi slt, %78, %c0_i32_57 : i32
      %c0_i32_58 = arith.constant 0 : i32
      %81 = arith.cmpi slt, %77, %c0_i32_58 : i32
      %82 = arith.xori %80, %81 : i1
      %83 = arith.andi %82, %79 : i1
      %84 = arith.addi %78, %77 : i32
      %85 = arith.select %83, %84, %78 : i32
      %c0_i32_59 = arith.constant 0 : i32
      %c0_i32_60 = arith.constant 0 : i32
      %86 = tpu.memref_slice %arg2[%c0_i32_59, %c0_i32_60] : memref<64x128xf32, #tpu.memory_space<any>> -> memref<1x128xf32, #tpu.memory_space<any>>
      %c0_i32_61 = arith.constant 0 : i32
      %c0_i32_62 = arith.constant 0 : i32
      %87 = tpu.memref_slice %arg4[%c0_i32_61, %c0_i32_62] : memref<16x128xf32, #tpu.memory_space<vmem>> -> memref<1x128xf32, #tpu.memory_space<vmem>>
      %88 = tpu.memref_slice %arg5[%85] : memref<8x!tpu.dma_semaphore, #tpu.memory_space<semaphore_mem>> -> memref<1x!tpu.dma_semaphore, #tpu.memory_space<semaphore_mem>>
      %89 = tpu.memref_squeeze %88 : memref<1x!tpu.dma_semaphore, #tpu.memory_space<semaphore_mem>> -> memref<!tpu.dma_semaphore, #tpu.memory_space<semaphore_mem>>
      tpu.wait_dma2 semaphore(%89 : memref<!tpu.dma_semaphore, #tpu.memory_space<semaphore_mem>>) src(%86 : memref<1x128xf32, #tpu.memory_space<any>>) dst(%87 : memref<1x128xf32, #tpu.memory_space<vmem>>)
      %c8_i32_63 = arith.constant 8 : i32
      %90 = arith.addi %arg6, %c8_i32_63 : i32
      %c16_i32_64 = arith.constant 16 : i32
      %91 = arith.cmpi slt, %90, %c16_i32_64 : i32
      %92 = arith.extui %91 : i1 to i32
      %c0_i32_65 = arith.constant 0 : i32
      %93 = arith.cmpi ne, %92, %c0_i32_65 : i32
      scf.if %93 {
        %c8_i32_66 = arith.constant 8 : i32
        %94 = arith.addi %arg6, %c8_i32_66 : i32
        %95 = arith.addi %0, %94 : i32
        %96 = arith.index_cast %95 : i32 to index
        %97 = memref.load %arg1[%96] : memref<16xi32, #tpu.memory_space<smem>>
        %c0_i32_67 = arith.constant 0 : i32
        %c63_i32_68 = arith.constant 63 : i32
        %98 = arith.maxsi %c0_i32_67, %97 : i32
        %99 = arith.minsi %c63_i32_68, %98 : i32
        %c0_i32_69 = arith.constant 0 : i32
        %100 = tpu.memref_slice %arg2[%99, %c0_i32_69] : memref<64x128xf32, #tpu.memory_space<any>> -> memref<1x128xf32, #tpu.memory_space<any>>
        %c0_i32_70 = arith.constant 0 : i32
        %101 = tpu.memref_slice %arg4[%94, %c0_i32_70] : memref<16x128xf32, #tpu.memory_space<vmem>> -> memref<1x128xf32, #tpu.memory_space<vmem>>
        %102 = tpu.memref_slice %arg5[%85] : memref<8x!tpu.dma_semaphore, #tpu.memory_space<semaphore_mem>> -> memref<1x!tpu.dma_semaphore, #tpu.memory_space<semaphore_mem>>
        %103 = tpu.memref_squeeze %102 : memref<1x!tpu.dma_semaphore, #tpu.memory_space<semaphore_mem>> -> memref<!tpu.dma_semaphore, #tpu.memory_space<semaphore_mem>>
        tpu.enqueue_dma source(%100 : memref<1x128xf32, #tpu.memory_space<any>>) target(%101 : memref<1x128xf32, #tpu.memory_space<vmem>>) target_semaphore(%103 : memref<!tpu.dma_semaphore, #tpu.memory_space<semaphore_mem>>)
      } else {
      }
    }
    %c16_i32_50 = arith.constant 16 : i32
    %c0 = arith.constant 0 : index
    %c0_51 = arith.constant 0 : index
    %74 = vector.load %arg4[%c0, %c0_51] : memref<16x128xf32, #tpu.memory_space<vmem>>, vector<16x128xf32>
    %c0_52 = arith.constant 0 : index
    %c0_53 = arith.constant 0 : index
    %75 = vector.load %arg3[%c0_52, %c0_53] : memref<16x128xf32, #tpu.memory_space<vmem>>, vector<16x128xf32>
    tpu.vector_store %arg3[%c0_52, %c0_53], %74 {strides = array<i32>} : memref<16x128xf32, #tpu.memory_space<vmem>>, vector<16x128xf32>,
    return
  }
  func.func @transform_1(%arg0: i32, %arg1: memref<16xi32, #tpu.memory_space<smem>>) -> (i32, i32) {
    %c0_i32 = arith.constant 0 : i32
    %c0_i32_0 = arith.constant 0 : i32
    return %arg0, %c0_i32 : i32, i32
  }
}

</mosaic_0001>

<llo_original>
// kernel: tpu_custom_call.1
$region0: #{tpu_custom_call.1}
  #allocation0 [shape = 'u32[]', space=smem, size = 0x4, offset = 0x4, fixed_abs, tag = 'smem constant byte address 0x4 - core index']
  #allocation1 [shape = 'u32[144,128]{1,0:T(1,128)}', space=vmem, size = 0x12000, scoped, tag = 'internal scratch']
  #allocation2 [shape = 'f32[16,128]{1,0:T(8,128)}', space=vmem, size = 0x2000, scoped, tag = 'scratch operand']
  #allocation3 [shape = 's32[8]{0}', space=sflag, size = 0x20, scoped, tag = 'scratch operand']
  #allocation4 [shape = 's32[1]{0}', space=sflag, size = 0x4, scoped, tag = 'scoped memory for tpu_custom_call.1']
  #allocation5 [shape = 'u8[512]{0}', space=smem, size = 0x200, scoped, tag = 'prefetched SMEM operand 0']
  #allocation8 [shape = 's32[]', space=sflag, size = 0x4, offset = 0, fixed_abs, tag = 'sflag constant byte address 0x0 - dummy sync flag']
  #allocation9 [shape = 's32[]', space=sflag, size = 0x4, offset = 0, fixed_abs, tag = 'sflag constant byte address 0x0 - dummy sync flag']
  #allocation10 [shape = 'u32[]', space=smem, size = 0x4, offset = 0x44, fixed_abs, tag = 'smem constant byte address 0x44 - assertion arg 0']
  #allocation11 [shape = 'u32[]', space=smem, size = 0x4, offset = 0x48, fixed_abs, tag = 'smem constant byte address 0x48 - assertion arg 1']
  #allocation12 [shape = 's32[]', space=sflag, size = 0x4, offset = 0, fixed_abs, tag = 'sflag constant byte address 0x0 - dummy sync flag']
  #allocation13 [shape = 's32[]', space=sflag, size = 0x4, offset = 0, fixed_abs, tag = 'sflag constant byte address 0x0 - dummy sync flag']
  #allocation14 [shape = 's32[]', space=sflag, size = 0x4, offset = 0, fixed_abs, tag = 'sflag constant byte address 0x0 - dummy sync flag']
  #allocation15 [shape = 's32[]', space=sflag, size = 0x4, offset = 0, fixed_abs, tag = 'sflag constant byte address 0x0 - dummy sync flag']
  #allocation16 [shape = 's32[]', space=sflag, size = 0x4, offset = 0, fixed_abs, tag = 'sflag constant byte address 0x0 - dummy sync flag']
  #allocation17 [shape = 's32[]', space=sflag, size = 0x4, offset = 0, fixed_abs, tag = 'sflag constant byte address 0x0 - dummy sync flag']
  #allocation18 [shape = 's32[]', space=sflag, size = 0x4, offset = 0, fixed_abs, tag = 'sflag constant byte address 0x0 - dummy sync flag']
  #allocation19 [shape = 's32[]', space=sflag, size = 0x4, offset = 0, fixed_abs, tag = 'sflag constant byte address 0x0 - dummy sync flag']
  #allocation20 [shape = 's32[]', space=sflag, size = 0x4, offset = 0, fixed_abs, tag = 'sflag constant byte address 0x0 - dummy sync flag']
  #allocation21 [shape = 's32[]', space=sflag, size = 0x4, offset = 0, fixed_abs, tag = 'sflag constant byte address 0x0 - dummy sync flag']
  #allocation22 [shape = 's32[]', space=sflag, size = 0x4, offset = 0, fixed_abs, tag = 'sflag constant byte address 0x0 - dummy sync flag']
  #allocation23 [shape = 's32[]', space=sflag, size = 0x4, offset = 0, fixed_abs, tag = 'sflag constant byte address 0x0 - dummy sync flag']
  #allocation24 [shape = 's32[]', space=sflag, size = 0x4, offset = 0, fixed_abs, tag = 'sflag constant byte address 0x0 - dummy sync flag']
  #allocation25 [shape = 's32[]', space=sflag, size = 0x4, offset = 0, fixed_abs, tag = 'sflag constant byte address 0x0 - dummy sync flag']
  #allocation26 [shape = 's32[]', space=sflag, size = 0x4, offset = 0, fixed_abs, tag = 'sflag constant byte address 0x0 - dummy sync flag']
  #allocation27 [shape = 's32[]', space=sflag, size = 0x4, offset = 0, fixed_abs, tag = 'sflag constant byte address 0x0 - dummy sync flag']
  %s0 = inlined_call_operand.hbm [shape: s32[16], index: 0, kind: input, shape index: {}]
  %s1 = inlined_call_operand.hbm [shape: f32[64,128], index: 1, kind: input, shape index: {}]
  %s2 = inlined_call_operand.hbm [shape: f32[16,128], index: 2, kind: output, shape index: {}]
  %s3 = sld [smem:[#allocation0]]
  $region57: #{tpu_custom_call.1} parent=0
    _
  %s5 = ssub.s32 1, %s3
  %s6 = scalar_select 0, %s5, %s3
  %8 = dma.hbm_to_smem %s0, 16, [#allocation5], [#allocation4]
  %9 = dma.done [#allocation4], 16
  %10 = sfence
  $region1: #{tpu_custom_call.1} parent=0
    #allocation6 [shape = 'u8[8192]{0}', space=vmem, size = 0x2000, scoped, tag = 'output window, operand 0, single buffered']
    #allocation7 [shape = 's32[1]{0}', space=sflag, size = 0x4, scoped, tag = 'scoped memory for tpu_custom_call.1']
    %11 = vsyncpa [#allocation7], 0
    %s12 = smul.u32 0, 16
    %s13 = sld [smem:[#allocation5 + %s12]]
    %p14 = scmp.gt.s32.totalorder %s13, 0
    %s15 = scalar_select %p14, %s13, 0
    %p16 = scmp.lt.s32.totalorder %s15, 63
    %s17 = scalar_select %p16, %s15, 63
    %s18 = smul.addr %s17, 16
    %s19 = scalar_lea.hbm %s1, %s18
    // Predicated region
    $region2: #{tpu_custom_call.1} parent=1 // pred_check
      _
    $region3: #{tpu_custom_call.1} parent=1 // pred_check_branch
      %21 = sbr.rel target = $region5
    $region4: #{tpu_custom_call.1} parent=1 // pred_region
      %22 = sst [smem:[#allocation10]] [#allocation9]
      %23 = sst [smem:[#allocation11]] [#allocation8]
    $region5: #{tpu_custom_call.1} parent=1 // pred_fallthru
      _
    %25 = shalt.err (0)
    %s27 = sshll.u32 [#allocation2], 4
    %s28 = int_to_ptr.vmem [resolvable:$true] %s27
    %30 = dma.hbm_to_vmem [thread:$0]  %s19, 16, %s28, [#allocation3]
    %s31 = sadd.s32 %s12, 1
    %s32 = sld [smem:[#allocation5 + %s31]]
    %p33 = scmp.gt.s32.totalorder %s32, 0
    %s34 = scalar_select %p33, %s32, 0
    %p35 = scmp.lt.s32.totalorder %s34, 63
    %s36 = scalar_select %p35, %s34, 63
    %s37 = smul.addr %s36, 16
    %s38 = scalar_lea.hbm %s1, %s37
    %s39 = scalar_lea.vmem [#allocation2], 1
    %s40 = scalar_lea.sflag [#allocation3], 1
    // Predicated region
    $region6: #{tpu_custom_call.1} parent=1 // pred_check
      _
    $region7: #{tpu_custom_call.1} parent=1 // pred_check_branch
      %42 = sbr.rel target = $region9
    $region8: #{tpu_custom_call.1} parent=1 // pred_region
      %43 = sst [smem:[#allocation10]] [#allocation13]
      %44 = sst [smem:[#allocation11]] [#allocation12]
    $region9: #{tpu_custom_call.1} parent=1 // pred_fallthru
      _
    %46 = shalt.err (0)
    %s48 = sshll.u32 %s39, 4
    %s49 = int_to_ptr.vmem [resolvable:$true] %s48
    %51 = dma.hbm_to_vmem [thread:$0]  %s38, 16, %s49, %s40
    %s52 = sadd.s32 %s12, 2
    %s53 = sld [smem:[#allocation5 + %s52]]
    %p54 = scmp.gt.s32.totalorder %s53, 0
    %s55 = scalar_select %p54, %s53, 0
    %p56 = scmp.lt.s32.totalorder %s55, 63
    %s57 = scalar_select %p56, %s55, 63
    %s58 = smul.addr %s57, 16
    %s59 = scalar_lea.hbm %s1, %s58
    %s60 = scalar_lea.vmem [#allocation2], 2
    %s61 = scalar_lea.sflag [#allocation3], 2
    // Predicated region
    $region10: #{tpu_custom_call.1} parent=1 // pred_check
      _
    $region11: #{tpu_custom_call.1} parent=1 // pred_check_branch
      %63 = sbr.rel target = $region13
    $region12: #{tpu_custom_call.1} parent=1 // pred_region
      %64 = sst [smem:[#allocation10]] [#allocation15]
      %65 = sst [smem:[#allocation11]] [#allocation14]
    $region13: #{tpu_custom_call.1} parent=1 // pred_fallthru
      _
    %67 = shalt.err (0)
    %s69 = sshll.u32 %s60, 4
    %s70 = int_to_ptr.vmem [resolvable:$true] %s69
    %72 = dma.hbm_to_vmem [thread:$0]  %s59, 16, %s70, %s61
    %s73 = sadd.s32 %s12, 3
    %s74 = sld [smem:[#allocation5 + %s73]]
    %p75 = scmp.gt.s32.totalorder %s74, 0
    %s76 = scalar_select %p75, %s74, 0
    %p77 = scmp.lt.s32.totalorder %s76, 63
    %s78 = scalar_select %p77, %s76, 63
    %s79 = smul.addr %s78, 16
    %s80 = scalar_lea.hbm %s1, %s79
    %s81 = scalar_lea.vmem [#allocation2], 3
    %s82 = scalar_lea.sflag [#allocation3], 3
    // Predicated region
    $region14: #{tpu_custom_call.1} parent=1 // pred_check
      _
    $region15: #{tpu_custom_call.1} parent=1 // pred_check_branch
      %84 = sbr.rel target = $region17
    $region16: #{tpu_custom_call.1} parent=1 // pred_region
      %85 = sst [smem:[#allocation10]] [#allocation17]
      %86 = sst [smem:[#allocation11]] [#allocation16]
    $region17: #{tpu_custom_call.1} parent=1 // pred_fallthru
      _
    %88 = shalt.err (0)
    %s90 = sshll.u32 %s81, 4
    %s91 = int_to_ptr.vmem [resolvable:$true] %s90
    %93 = dma.hbm_to_vmem [thread:$0]  %s80, 16, %s91, %s82
    %s94 = sadd.s32 %s12, 4
    %s95 = sld [smem:[#allocation5 + %s94]]
    %p96 = scmp.gt.s32.totalorder %s95, 0
    %s97 = scalar_select %p96, %s95, 0
    %p98 = scmp.lt.s32.totalorder %s97, 63
    %s99 = scalar_select %p98, %s97, 63
    %s100 = smul.addr %s99, 16
    %s101 = scalar_lea.hbm %s1, %s100
    %s102 = scalar_lea.vmem [#allocation2], 4
    %s103 = scalar_lea.sflag [#allocation3], 4
    // Predicated region
    $region18: #{tpu_custom_call.1} parent=1 // pred_check
      _
    $region19: #{tpu_custom_call.1} parent=1 // pred_check_branch
      %105 = sbr.rel target = $region21
    $region20: #{tpu_custom_call.1} parent=1 // pred_region
      %106 = sst [smem:[#allocation10]] [#allocation19]
      %107 = sst [smem:[#allocation11]] [#allocation18]
    $region21: #{tpu_custom_call.1} parent=1 // pred_fallthru
      _
    %109 = shalt.err (0)
    %s111 = sshll.u32 %s102, 4
    %s112 = int_to_ptr.vmem [resolvable:$true] %s111
    %114 = dma.hbm_to_vmem [thread:$0]  %s101, 16, %s112, %s103
    %s115 = sadd.s32 %s12, 5
    %s116 = sld [smem:[#allocation5 + %s115]]
    %p117 = scmp.gt.s32.totalorder %s116, 0
    %s118 = scalar_select %p117, %s116, 0
    %p119 = scmp.lt.s32.totalorder %s118, 63
    %s120 = scalar_select %p119, %s118, 63
    %s121 = smul.addr %s120, 16
    %s122 = scalar_lea.hbm %s1, %s121
    %s123 = scalar_lea.vmem [#allocation2], 5
    %s124 = scalar_lea.sflag [#allocation3], 5
    // Predicated region
    $region22: #{tpu_custom_call.1} parent=1 // pred_check
      _
    $region23: #{tpu_custom_call.1} parent=1 // pred_check_branch
      %126 = sbr.rel target = $region25
    $region24: #{tpu_custom_call.1} parent=1 // pred_region
      %127 = sst [smem:[#allocation10]] [#allocation21]
      %128 = sst [smem:[#allocation11]] [#allocation20]
    $region25: #{tpu_custom_call.1} parent=1 // pred_fallthru
      _
    %130 = shalt.err (0)
    %s132 = sshll.u32 %s123, 4
    %s133 = int_to_ptr.vmem [resolvable:$true] %s132
    %135 = dma.hbm_to_vmem [thread:$0]  %s122, 16, %s133, %s124
    %s136 = sadd.s32 %s12, 6
    %s137 = sld [smem:[#allocation5 + %s136]]
    %p138 = scmp.gt.s32.totalorder %s137, 0
    %s139 = scalar_select %p138, %s137, 0
    %p140 = scmp.lt.s32.totalorder %s139, 63
    %s141 = scalar_select %p140, %s139, 63
    %s142 = smul.addr %s141, 16
    %s143 = scalar_lea.hbm %s1, %s142
    %s144 = scalar_lea.vmem [#allocation2], 6
    %s145 = scalar_lea.sflag [#allocation3], 6
    // Predicated region
    $region26: #{tpu_custom_call.1} parent=1 // pred_check
      _
    $region27: #{tpu_custom_call.1} parent=1 // pred_check_branch
      %147 = sbr.rel target = $region29
    $region28: #{tpu_custom_call.1} parent=1 // pred_region
      %148 = sst [smem:[#allocation10]] [#allocation23]
      %149 = sst [smem:[#allocation11]] [#allocation22]
    $region29: #{tpu_custom_call.1} parent=1 // pred_fallthru
      _
    %151 = shalt.err (0)
    %s153 = sshll.u32 %s144, 4
    %s154 = int_to_ptr.vmem [resolvable:$true] %s153
    %156 = dma.hbm_to_vmem [thread:$0]  %s143, 16, %s154, %s145
    %s157 = sadd.s32 %s12, 7
    %s158 = sld [smem:[#allocation5 + %s157]]
    %p159 = scmp.gt.s32.totalorder %s158, 0
    %s160 = scalar_select %p159, %s158, 0
    %p161 = scmp.lt.s32.totalorder %s160, 63
    %s162 = scalar_select %p161, %s160, 63
    %s163 = smul.addr %s162, 16
    %s164 = scalar_lea.hbm %s1, %s163
    %s165 = scalar_lea.vmem [#allocation2], 7
    %s166 = scalar_lea.sflag [#allocation3], 7
    // Predicated region
    $region30: #{tpu_custom_call.1} parent=1 // pred_check
      _
    $region31: #{tpu_custom_call.1} parent=1 // pred_check_branch
      %168 = sbr.rel target = $region33
    $region32: #{tpu_custom_call.1} parent=1 // pred_region
      %169 = sst [smem:[#allocation10]] [#allocation25]
      %170 = sst [smem:[#allocation11]] [#allocation24]
    $region33: #{tpu_custom_call.1} parent=1 // pred_fallthru
      _
    %172 = shalt.err (0)
    %s174 = sshll.u32 %s165, 4
    %s175 = int_to_ptr.vmem [resolvable:$true] %s174
    %177 = dma.hbm_to_vmem [thread:$0]  %s164, 16, %s175, %s166
    loop: start=0, step=1, limit=16
    $region34: #{tpu_custom_call.1} parent=1 // loop_pre_header
      _
    $region35: #{tpu_custom_call.1} parent=1 // loop_header
      %s179 = sphi 0, %s183
      %p180 = scmp.ge.s32.totalorder %s179, 16
    $region36: #{tpu_custom_call.1} parent=1 // loop_header_branch
      %182 = sbr.rel (%p180) target = $region40
    $region37: #{tpu_custom_call.1} parent=1 // loop_body
      %p184 = scmp.lt.s32.totalorder %s179, 0
      %s185 = ssub.s32 0, %s179
      %s186 = scalar_select %p184, %s185, %s179
      %s187 = sand.u32 %s186, 7
      %s188 = ssub.s32 0, %s187
      %s189 = scalar_select %p184, %s188, %s187
      %p190 = scmp.ne.s32.totalorder %s189, 0
      %p191 = scmp.lt.s32.totalorder %s189, 0
      %p192 = pnand %p191, %p190
      %p193 = pneg %p192
      %s194 = sadd.s32 %s189, 8
      %s195 = scalar_select %p193, %s194, %s189
      %s196 = scalar_lea.sflag [#allocation3], %s195
      %s197 = smul.u32 1, 1
      %s198 = sshll.u32 %s197, 4
      %199 = dma.done %s196, %s198
      %s200 = sadd.s32 %s179, 8
      %p201 = scmp.lt.s32.totalorder %s200, 16
      // Predicated region
      $region41: #{tpu_custom_call.1} parent=37 // pred_check
        %p202 = pneg %p201
      $region42: #{tpu_custom_call.1} parent=37 // pred_check_branch
        %204 = sbr.rel (%p202) target = $region44
      $region43: #{tpu_custom_call.1} parent=37 // pred_region
        %s205 = sadd.s32 %s12, %s200
        %s206 = sld [smem:[#allocation5 + %s205]]
        %p207 = scmp.gt.s32.totalorder %s206, 0
        %s208 = scalar_select %p207, %s206, 0
        %p209 = scmp.lt.s32.totalorder %s208, 63
        %s210 = scalar_select %p209, %s208, 63
        %s211 = smul.addr %s210, 16
        %s212 = scalar_lea.hbm %s1, %s211
        %s213 = scalar_lea.vmem [#allocation2], %s200
        // Predicated region
        $region45: #{tpu_custom_call.1} parent=43 // pred_check
          _
        $region46: #{tpu_custom_call.1} parent=43 // pred_check_branch
          %215 = sbr.rel target = $region48
        $region47: #{tpu_custom_call.1} parent=43 // pred_region
          %216 = sst [smem:[#allocation10]] [#allocation27]
          %217 = sst [smem:[#allocation11]] [#allocation26]
        $region48: #{tpu_custom_call.1} parent=43 // pred_fallthru
          _
        %219 = shalt.err (0)
        %s221 = sshll.u32 %s213, 4
        %s222 = int_to_ptr.vmem [resolvable:$true] %s221
        %224 = dma.hbm_to_vmem [thread:$0]  %s212, 16, %s222, %s196
      $region44: #{tpu_custom_call.1} parent=37 // pred_fallthru
        _
    $region38: #{tpu_custom_call.1} parent=1 // loop_footer
      %s183 = sadd.s32 1, %s179
    $region39: #{tpu_custom_call.1} parent=1 // loop_footer_branch
      %178 = sbr.rel target = $region35
    $region40: #{tpu_custom_call.1} parent=1 // loop_exit
      _
    %v225 = vld [vmem:[#allocation2] sm:$0xff]
    %v226 = vld [vmem:[#allocation2 + $0x8] sm:$0xff]
    %227 = vst [vmem:[#allocation6] sm:$0xff] %v225
    %228 = vst [vmem:[#allocation6 + $0x8] sm:$0xff] %v226
    // Predicated region
    $region49: #{tpu_custom_call.1} parent=1 // pred_check
      _
    $region50: #{tpu_custom_call.1} parent=1 // pred_check_branch
      %230 = sbr.rel (0) target = $region52
    $region51: #{tpu_custom_call.1} parent=1 // pred_region
      %s232 = ssub.s32 256, 256
      %233 = vsyncadd [#allocation7], %s232
      %s234 = sshll.u32 [#allocation6], 4
      %s235 = int_to_ptr.vmem [resolvable:$true] %s234
      %240 = dma.vmem_to_hbm [thread:$0]  %s235, 256, %s2, [#allocation7], 128, 128, 8
    $region52: #{tpu_custom_call.1} parent=1 // pred_fallthru
      _
    // Predicated region
    $region53: #{tpu_custom_call.1} parent=1 // pred_check
      _
    $region54: #{tpu_custom_call.1} parent=1 // pred_check_branch
      %242 = sbr.rel (0) target = $region56
    $region55: #{tpu_custom_call.1} parent=1 // pred_region
      %243 = dma.done [#allocation7], 256
    $region56: #{tpu_custom_call.1} parent=1 // pred_fallthru
      _
    %244 = vsyncpa [#allocation7], 1
  %245 = vsyncmov [#allocation3]
  %s246 = vpop.sfrf %245
  %p247 = scmp.eq.s32.totalorder %s246, 0
  %p248 = pneg %p247
  %250 = shalt.err (%p248)
  %s251 = scalar_lea.sflag [#allocation3], 1
  %252 = vsyncmov %s251
  %s253 = vpop.sfrf %252
  %p254 = scmp.eq.s32.totalorder %s253, 0
  %p255 = pneg %p254
  %257 = shalt.err (%p255)
  %s258 = scalar_lea.sflag [#allocation3], 2
  %259 = vsyncmov %s258
  %s260 = vpop.sfrf %259
  %p261 = scmp.eq.s32.totalorder %s260, 0
  %p262 = pneg %p261
  %264 = shalt.err (%p262)
  %s265 = scalar_lea.sflag [#allocation3], 3
  %266 = vsyncmov %s265
  %s267 = vpop.sfrf %266
  %p268 = scmp.eq.s32.totalorder %s267, 0
  %p269 = pneg %p268
  %271 = shalt.err (%p269)
  %s272 = scalar_lea.sflag [#allocation3], 4
  %273 = vsyncmov %s272
  %s274 = vpop.sfrf %273
  %p275 = scmp.eq.s32.totalorder %s274, 0
  %p276 = pneg %p275
  %278 = shalt.err (%p276)
  %s279 = scalar_lea.sflag [#allocation3], 5
  %280 = vsyncmov %s279
  %s281 = vpop.sfrf %280
  %p282 = scmp.eq.s32.totalorder %s281, 0
  %p283 = pneg %p282
  %285 = shalt.err (%p283)
  %s286 = scalar_lea.sflag [#allocation3], 6
  %287 = vsyncmov %s286
  %s288 = vpop.sfrf %287
  %p289 = scmp.eq.s32.totalorder %s288, 0
  %p290 = pneg %p289
  %292 = shalt.err (%p290)
  %s293 = scalar_lea.sflag [#allocation3], 7
  %294 = vsyncmov %s293
  %s295 = vpop.sfrf %294
  %p296 = scmp.eq.s32.totalorder %s295, 0
  %p297 = pneg %p296
  %299 = shalt.err (%p297)

</llo_original>
